<compile_context>
chip_gen: v7x
topology: tpu7x:2x2x1
jax: 0.10.0
libtpu: 0.0.40
codegen_flags: <defaults>
</compile_context>

<pallas_src>
import functools

import jax
import jax.numpy as jnp
from jax.experimental import pallas as pl
from jax.experimental.pallas import tpu as pltpu

# Hyperparameters implied by show_lexeme.__init__
MO_DIM = 48          # rotation_size(3) * joint_size(16) = motion channels out
FEATURE_SIZE = 96    # lexeme / latent feature channels in
LEXICON_SIZE = 50    # codebook size (unused on the decode-only path)
K = 3                # temporal conv kernel width

LANE_ALIGN = 128     # lane-dense operands/outputs: last dim multiple of 128
MAX_LANE_TILE = 2048 # per-step lane tile (~2 KB/column live -> ~4 MiB), safe
                     # under v7x 64 MiB VMEM / 32 MiB default scoped limit;
                     # also a multiple of 256 for the v6e MXU.


def _round_up(x, m):
    return (x + m - 1) // m * m


def _decoder_kernel(x_ref, w1_ref, b1_ref, w2_ref, b2_ref, o_ref, *,
                    period, t_real):
    # x_ref : (96, L)   f32  lane tile of the packed (C, lanes) slab
    # w1_ref: (96, 288) bf16 im2col-fused conv1 weight  W[c_out, k*96 + c_in]
    # b1_ref: (96, 1)   f32
    # w2_ref: (48, 288) bf16 im2col-fused conv2 weight
    # b2_ref: (48, 1)   f32
    # o_ref : (48, L)   f32  lane-dense output tile
    # period: per-batch-element lane stride; t_real: true time length (<= period)
    lane = x_ref.shape[1]
    col = jax.lax.broadcasted_iota(jnp.int32, (1, lane), 1)
    tau = col % period                  # within-element time index
    has_prev = tau != 0                 # valid t-1 neighbour
    has_next = tau != (t_real - 1)      # valid t+1 neighbour (not last real col)

    def im2col(a):
        # a: (96, L) f32 -> (288, L) bf16 stack [a[t-1]; a[t]; a[t+1]], zeroed
        # where a tap would cross an element's time boundary (Conv1d pad=1).
        # roll runs on the XLU slot; masks stay f32; only full-width writes.
        prev = jnp.where(has_prev, pltpu.roll(a, shift=1, axis=1), 0.0)
        nxt = jnp.where(has_next, pltpu.roll(a, shift=lane - 1, axis=1), 0.0)
        return jnp.concatenate(
            [prev.astype(jnp.bfloat16),
             a.astype(jnp.bfloat16),
             nxt.astype(jnp.bfloat16)], axis=0)

    # Layer 1: Conv1d(96 -> 96, k=3, pad=1) as one bf16 MXU matmul (f32 acc).
    h = jnp.dot(w1_ref[...], im2col(x_ref[...]),
                preferred_element_type=jnp.float32)
    h = h + b1_ref[...]
    h = jnp.maximum(h, 0.2 * h)                          # LeakyReLU(0.2), f32

    # Layer 2: Conv1d(96 -> 48, k=3, pad=1); zero-pads post-activation h,
    # matching PyTorch semantics.
    y = jnp.dot(w2_ref[...], im2col(h), preferred_element_type=jnp.float32)
    o_ref[...] = (y + b2_ref[...]).astype(o_ref.dtype)


def vqvae_gcn_decode(z, params):
    """z: (B, FEATURE_SIZE, T) float32 quantized lexeme features (NCW)."""
    B, C, T = z.shape
    assert C == FEATURE_SIZE
    w1, b1, w2, b2 = params

    # im2col-fused weights: Wf[c_out, k*C_in + c_in] = w[k, c_out, c_in];
    # bf16 for native MXU throughput (accumulation stays f32).
    # NOTE: real PyTorch Conv1d checkpoints are (C_out, C_in, K) -> permute
    # (2, 0, 1) to this layout before fusing.
    w1f = jnp.transpose(w1, (1, 0, 2)).reshape(
        FEATURE_SIZE, K * FEATURE_SIZE).astype(jnp.bfloat16)
    w2f = jnp.transpose(w2, (1, 0, 2)).reshape(
        MO_DIM, K * FEATURE_SIZE).astype(jnp.bfloat16)

    BT = B * T
    if _round_up(BT, LANE_ALIGN) <= MAX_LANE_TILE:
        # Small problem: a single lane-dense tile, contiguous (b, t) packing.
        period = T
        lane_total = _round_up(BT, LANE_ALIGN)
        lane_tile, n_tiles = lane_total, 1
        x_packed = jnp.transpose(z, (1, 0, 2)).reshape(C, BT)
        x_packed = jnp.pad(x_packed, ((0, 0), (0, lane_total - BT)))
    else:
        # Large problem: pad each element's time axis to a 128 multiple so
        # lane-tile edges coincide with element boundaries (no halo needed:
        # the +/-1 taps are masked there), then tile the lane axis so the
        # pipeline double-buffers and v7x shards across both TensorCores.
        period = _round_up(T, LANE_ALIGN)
        elems_per_tile = max(1, MAX_LANE_TILE // period)
        lane_tile = elems_per_tile * period
        b_pad = _round_up(B, elems_per_tile)
        lane_total = b_pad * period
        n_tiles = lane_total // lane_tile
        zp = jnp.pad(z, ((0, b_pad - B), (0, 0), (0, period - T)))
        x_packed = jnp.transpose(zp, (1, 0, 2)).reshape(C, lane_total)
        # TODO(synk): for very long T a halo'd intra-element lane tiling (or
        # gridding over B directly, skipping the pack transpose) would bound
        # VMEM further; one per-element tile is used here.

    out = pl.pallas_call(
        functools.partial(_decoder_kernel, period=period, t_real=T),
        out_shape=jax.ShapeDtypeStruct((MO_DIM, lane_total), jnp.float32),
        grid=(n_tiles,),
        in_specs=[
            pl.BlockSpec((FEATURE_SIZE, lane_tile), lambda i: (0, i)),
            pl.BlockSpec((FEATURE_SIZE, K * FEATURE_SIZE), lambda i: (0, 0)),
            pl.BlockSpec((FEATURE_SIZE, 1), lambda i: (0, 0)),
            pl.BlockSpec((MO_DIM, K * FEATURE_SIZE), lambda i: (0, 0)),
            pl.BlockSpec((MO_DIM, 1), lambda i: (0, 0)),
        ],
        out_specs=pl.BlockSpec((MO_DIM, lane_tile), lambda i: (0, i)),
        compiler_params=pltpu.CompilerParams(
            dimension_semantics=("parallel",)),
    )(x_packed, w1f, b1, w2f, b2)

    # Unpack lanes back to the decoder's (B, MO_DIM, T) NCW output
    # (layout plumbing only; negligible at these sizes).
    out = out[:, :B * period].reshape(MO_DIM, B, period)[:, :, :T]
    return jnp.transpose(out, (1, 0, 2))


def forward_forlxm(lexemes, params):
    # Mirrors VQVAE_gcn.forward_forlxm(lexemes) -> (_, x_hat, _):
    # lexemes are already codebook features, so only the decoder runs.
    x_hat = vqvae_gcn_decode(lexemes, params)
    return None, x_hat, None


def show_lexeme_forward(lexemes, params):
    # Exactly mirrors show_lexeme.forward (reshape semantics, not transpose).
    N, D, B = lexemes.shape
    lexemes = jnp.reshape(lexemes, (B, D, N))
    _, x_hat, _ = forward_forlxm(lexemes, params)
    L, D2, B2 = x_hat.shape
    x_hat = jnp.reshape(x_hat, (1, D2, L * B2))
    sliiced_x_hats = x_hat[:, :, 10:x_hat.shape[2] - 10]
    if lexemes.shape[0] == 1:
        return x_hat
    else:
        return sliiced_x_hats


def init_params(key):
    k1, k2, k3, k4 = jax.random.split(key, 4)
    # Stored as (K, C_out, C_in); see note in vqvae_gcn_decode for checkpoints.
    w1 = 0.05 * jax.random.normal(k1, (K, FEATURE_SIZE, FEATURE_SIZE), jnp.float32)
    b1 = 0.01 * jax.random.normal(k2, (FEATURE_SIZE, 1), jnp.float32)
    w2 = 0.05 * jax.random.normal(k3, (K, MO_DIM, FEATURE_SIZE), jnp.float32)
    b2 = 0.01 * jax.random.normal(k4, (MO_DIM, 1), jnp.float32)
    return (w1, b1, w2, b2)


if __name__ == "__main__":
    key = jax.random.PRNGKey(0)
    pkey, xkey = jax.random.split(key)
    params = init_params(pkey)

    # lexemes: (N, D, B) = (time, feature_size, batch)
    N, D, B = 32, FEATURE_SIZE, 2
    lexemes = jax.random.normal(xkey, (N, D, B), jnp.float32)

    fwd = jax.jit(show_lexeme_forward)
    out = jax.block_until_ready(fwd(lexemes, params))
    assert out.shape == (1, MO_DIM, B * N - 20), out.shape
    assert out.dtype == jnp.float32
    print("KERNEL_OK")
</pallas_src>

<mosaic_0001>
module attributes {stable_mosaic.version = 11 : i64} {
  func.func @_decoder_kernel(%arg0: i32, %arg1: memref<96x128xf32, #tpu.memory_space<vmem>>, %arg2: memref<96x288xbf16, #tpu.memory_space<vmem>>, %arg3: memref<96x1xf32, #tpu.memory_space<vmem>>, %arg4: memref<48x288xbf16, #tpu.memory_space<vmem>>, %arg5: memref<48x1xf32, #tpu.memory_space<vmem>>, %arg6: memref<48x128xf32, #tpu.memory_space<vmem>>) attributes {dimension_semantics = [#tpu.dimension_semantics<parallel>], iteration_bounds = array<i64: 1>, scalar_prefetch = 0 : i64, scratch_operands = 0 : i64, tpu.core_type = #tpu.core_type<tc>, window_params = [{transform_indices = @transform_0, window_bounds = array<i64: 96, 128>}, {pipeline_mode = #tpu.pipeline_mode<synchronous>, transform_indices = @transform_1, window_bounds = array<i64: 96, 288>}, {pipeline_mode = #tpu.pipeline_mode<synchronous>, transform_indices = @transform_2, window_bounds = array<i64: 96, 1>}, {pipeline_mode = #tpu.pipeline_mode<synchronous>, transform_indices = @transform_3, window_bounds = array<i64: 48, 288>}, {pipeline_mode = #tpu.pipeline_mode<synchronous>, transform_indices = @transform_4, window_bounds = array<i64: 48, 1>}, {transform_indices = @transform_5, window_bounds = array<i64: 48, 128>}]} {
    %0 = tpu.iota {dimensions = array<i32: 1>} : vector<1x128xi32>
    %c32_i32 = arith.constant 32 : i32
    %c0_i32 = arith.constant 0 : i32
    %1 = arith.cmpi eq, %c32_i32, %c0_i32 : i32
    %c1_i32 = arith.constant 1 : i32
    %2 = arith.select %1, %c1_i32, %c32_i32 : i32
    %3 = vector.broadcast %2 : i32 to vector<1x128xi32>
    %4 = arith.remsi %0, %3 : vector<1x128xi32>
    %c0_i32_0 = arith.constant 0 : i32
    %5 = vector.broadcast %c0_i32_0 : i32 to vector<1x128xi32>
    %6 = arith.cmpi ne, %4, %5 : vector<1x128xi32>
    %c0_i32_1 = arith.constant 0 : i32
    %7 = vector.broadcast %c0_i32_1 : i32 to vector<1x128xi32>
    %8 = arith.cmpi slt, %4, %7 : vector<1x128xi32>
    %c0_i32_2 = arith.constant 0 : i32
    %9 = arith.cmpi slt, %2, %c0_i32_2 : i32
    %10 = vector.broadcast %9 : i1 to vector<1x128xi1>
    %11 = vector.broadcast %10 : vector<1x128xi1> to vector<1x128xi1>
    %12 = arith.xori %8, %11 : vector<1x128xi1>
    %13 = arith.andi %12, %6 : vector<1x128xi1>
    %14 = vector.broadcast %2 : i32 to vector<1x128xi32>
    %15 = arith.addi %4, %14 : vector<1x128xi32>
    %16 = arith.select %13, %15, %4 : vector<1x128xi1>, vector<1x128xi32>
    %c0_i32_3 = arith.constant 0 : i32
    %17 = vector.broadcast %c0_i32_3 : i32 to vector<1x128xi32>
    %18 = arith.cmpi ne, %16, %17 : vector<1x128xi32>
    %c31_i32 = arith.constant 31 : i32
    %19 = vector.broadcast %c31_i32 : i32 to vector<1x128xi32>
    %20 = arith.cmpi ne, %16, %19 : vector<1x128xi32>
    %c0 = arith.constant 0 : index
    %c0_4 = arith.constant 0 : index
    %21 = vector.load %arg2[%c0, %c0_4] : memref<96x288xbf16, #tpu.memory_space<vmem>>, vector<96x288xbf16>
    %c0_5 = arith.constant 0 : index
    %c0_6 = arith.constant 0 : index
    %22 = vector.load %arg1[%c0_5, %c0_6] : memref<96x128xf32, #tpu.memory_space<vmem>>, vector<96x128xf32>
    %c1_i32_7 = arith.constant 1 : i32
    %23 = tpu.dynamic_rotate %22 by %c1_i32_7 dim 1 : vector<96x128xf32>, i32 -> vector<96x128xf32>
    %cst = arith.constant 0.000000e+00 : f32
    %24 = vector.shape_cast %18 : vector<1x128xi1> to vector<1x128xi1>
    %25 = vector.broadcast %24 : vector<1x128xi1> to vector<96x128xi1>
    %26 = vector.broadcast %cst : f32 to vector<96x128xf32>
    %27 = arith.select %25, %23, %26 : vector<96x128xi1>, vector<96x128xf32>
    %c127_i32 = arith.constant 127 : i32
    %28 = tpu.dynamic_rotate %22 by %c127_i32 dim 1 : vector<96x128xf32>, i32 -> vector<96x128xf32>
    %cst_8 = arith.constant 0.000000e+00 : f32
    %29 = vector.shape_cast %20 : vector<1x128xi1> to vector<1x128xi1>
    %30 = vector.broadcast %29 : vector<1x128xi1> to vector<96x128xi1>
    %31 = vector.broadcast %cst_8 : f32 to vector<96x128xf32>
    %32 = arith.select %30, %28, %31 : vector<96x128xi1>, vector<96x128xf32>
    %33 = arith.truncf %27 : vector<96x128xf32> to vector<96x128xbf16>
    %34 = arith.truncf %22 : vector<96x128xf32> to vector<96x128xbf16>
    %35 = arith.truncf %32 : vector<96x128xf32> to vector<96x128xbf16>
    %36 = tpu.concatenate %33, %34, %35 in 0 : vector<96x128xbf16>, vector<96x128xbf16>, vector<96x128xbf16> -> vector<288x128xbf16>
    %cst_9 = arith.constant dense<0.000000e+00> : vector<96x128xf32>
    %37 = tpu.matmul %21, %36, %cst_9 {dimension_numbers = #tpu.dot_dimension_numbers<[1], [0], [0], [1], [0, 0, 1, 1], [], []>} : vector<96x288xbf16>, vector<288x128xbf16>, vector<96x128xf32> -> vector<96x128xf32>
    %c0_10 = arith.constant 0 : index
    %c0_11 = arith.constant 0 : index
    %38 = vector.load %arg3[%c0_10, %c0_11] : memref<96x1xf32, #tpu.memory_space<vmem>>, vector<96x1xf32>
    %39 = vector.broadcast %38 : vector<96x1xf32> to vector<96x128xf32>
    %40 = arith.addf %37, %39 : vector<96x128xf32>
    %cst_12 = arith.constant 2.000000e-01 : f32
    %41 = vector.broadcast %cst_12 : f32 to vector<96x128xf32>
    %42 = arith.mulf %41, %40 : vector<96x128xf32>
    %43 = arith.maximumf %40, %42 : vector<96x128xf32>
    %c0_13 = arith.constant 0 : index
    %c0_14 = arith.constant 0 : index
    %44 = vector.load %arg4[%c0_13, %c0_14] : memref<48x288xbf16, #tpu.memory_space<vmem>>, vector<48x288xbf16>
    %c1_i32_15 = arith.constant 1 : i32
    %45 = tpu.dynamic_rotate %43 by %c1_i32_15 dim 1 : vector<96x128xf32>, i32 -> vector<96x128xf32>
    %cst_16 = arith.constant 0.000000e+00 : f32
    %46 = vector.shape_cast %18 : vector<1x128xi1> to vector<1x128xi1>
    %47 = vector.broadcast %46 : vector<1x128xi1> to vector<96x128xi1>
    %48 = vector.broadcast %cst_16 : f32 to vector<96x128xf32>
    %49 = arith.select %47, %45, %48 : vector<96x128xi1>, vector<96x128xf32>
    %c127_i32_17 = arith.constant 127 : i32
    %50 = tpu.dynamic_rotate %43 by %c127_i32_17 dim 1 : vector<96x128xf32>, i32 -> vector<96x128xf32>
    %cst_18 = arith.constant 0.000000e+00 : f32
    %51 = vector.shape_cast %20 : vector<1x128xi1> to vector<1x128xi1>
    %52 = vector.broadcast %51 : vector<1x128xi1> to vector<96x128xi1>
    %53 = vector.broadcast %cst_18 : f32 to vector<96x128xf32>
    %54 = arith.select %52, %50, %53 : vector<96x128xi1>, vector<96x128xf32>
    %55 = arith.truncf %49 : vector<96x128xf32> to vector<96x128xbf16>
    %56 = arith.truncf %43 : vector<96x128xf32> to vector<96x128xbf16>
    %57 = arith.truncf %54 : vector<96x128xf32> to vector<96x128xbf16>
    %58 = tpu.concatenate %55, %56, %57 in 0 : vector<96x128xbf16>, vector<96x128xbf16>, vector<96x128xbf16> -> vector<288x128xbf16>
    %cst_19 = arith.constant dense<0.000000e+00> : vector<48x128xf32>
    %59 = tpu.matmul %44, %58, %cst_19 {dimension_numbers = #tpu.dot_dimension_numbers<[1], [0], [0], [1], [0, 0, 1, 1], [], []>} : vector<48x288xbf16>, vector<288x128xbf16>, vector<48x128xf32> -> vector<48x128xf32>
    %c0_20 = arith.constant 0 : index
    %c0_21 = arith.constant 0 : index
    %60 = vector.load %arg5[%c0_20, %c0_21] : memref<48x1xf32, #tpu.memory_space<vmem>>, vector<48x1xf32>
    %61 = vector.broadcast %60 : vector<48x1xf32> to vector<48x128xf32>
    %62 = arith.addf %59, %61 : vector<48x128xf32>
    %c0_22 = arith.constant 0 : index
    %c0_23 = arith.constant 0 : index
    %63 = vector.load %arg6[%c0_22, %c0_23] : memref<48x128xf32, #tpu.memory_space<vmem>>, vector<48x128xf32>
    tpu.vector_store %arg6[%c0_22, %c0_23], %62 {strides = array<i32>} : memref<48x128xf32, #tpu.memory_space<vmem>>, vector<48x128xf32>,
    return
  }
  func.func @transform_0(%arg0: i32) -> (i32, i32) {
    %c0_i32 = arith.constant 0 : i32
    %c0_i32_0 = arith.constant 0 : i32
    return %c0_i32, %arg0 : i32, i32
  }
  func.func @transform_1(%arg0: i32) -> (i32, i32) {
    %c0_i32 = arith.constant 0 : i32
    %c0_i32_0 = arith.constant 0 : i32
    %c0_i32_1 = arith.constant 0 : i32
    return %c0_i32, %c0_i32_0 : i32, i32
  }
  func.func @transform_2(%arg0: i32) -> (i32, i32) {
    %c0_i32 = arith.constant 0 : i32
    %c0_i32_0 = arith.constant 0 : i32
    %c0_i32_1 = arith.constant 0 : i32
    return %c0_i32, %c0_i32_0 : i32, i32
  }
  func.func @transform_3(%arg0: i32) -> (i32, i32) {
    %c0_i32 = arith.constant 0 : i32
    %c0_i32_0 = arith.constant 0 : i32
    %c0_i32_1 = arith.constant 0 : i32
    return %c0_i32, %c0_i32_0 : i32, i32
  }
  func.func @transform_4(%arg0: i32) -> (i32, i32) {
    %c0_i32 = arith.constant 0 : i32
    %c0_i32_0 = arith.constant 0 : i32
    %c0_i32_1 = arith.constant 0 : i32
    return %c0_i32, %c0_i32_0 : i32, i32
  }
  func.func @transform_5(%arg0: i32) -> (i32, i32) {
    %c0_i32 = arith.constant 0 : i32
    %c0_i32_0 = arith.constant 0 : i32
    return %c0_i32, %arg0 : i32, i32
  }
}

</mosaic_0001>

<llo_original>
// kernel: show_lexeme_forward.1
$region0: #{show_lexeme_forward.1}
  #allocation0 [shape = 'u32[]', space=smem, size = 0x4, offset = 0x4, fixed_abs, tag = 'smem constant byte address 0x4 - core index']
  #allocation1 [shape = 'u32[144,128]{1,0:T(1,128)}', space=vmem, size = 0x12000, scoped, tag = 'internal scratch']
  %s0 = inlined_call_operand.vmem [shape: f32[96,128], index: 0, kind: input, shape index: {}]
  %s1 = inlined_call_operand.vmem [shape: bf16[96,288], index: 1, kind: input, shape index: {}]
  %s2 = inlined_call_operand.vmem [shape: f32[96,1], index: 2, kind: input, shape index: {}]
  %s3 = inlined_call_operand.vmem [shape: bf16[48,288], index: 3, kind: input, shape index: {}]
  %s4 = inlined_call_operand.vmem [shape: f32[48,1], index: 4, kind: input, shape index: {}]
  %s5 = inlined_call_operand.vmem [shape: f32[48,128], index: 5, kind: output, shape index: {}]
  %s6 = sld [smem:[#allocation0]]
  $region30: #{show_lexeme_forward.1} parent=0
    _
  %s8 = ssub.s32 1, %s6
  %s9 = scalar_select 0, %s8, %s6
  // Predicated region
  $region2: #{show_lexeme_forward.1} parent=0 // pred_check
    _
  $region3: #{show_lexeme_forward.1} parent=0 // pred_check_branch
    %11 = sbr.rel (0) target = $region5
  $region4: #{show_lexeme_forward.1} parent=0 // pred_region
    _
  $region5: #{show_lexeme_forward.1} parent=0 // pred_fallthru
    _
  // Predicated region
  $region6: #{show_lexeme_forward.1} parent=0 // pred_check
    _
  $region7: #{show_lexeme_forward.1} parent=0 // pred_check_branch
    %13 = sbr.rel (0) target = $region9
  $region8: #{show_lexeme_forward.1} parent=0 // pred_region
    _
  $region9: #{show_lexeme_forward.1} parent=0 // pred_fallthru
    _
  // Predicated region
  $region10: #{show_lexeme_forward.1} parent=0 // pred_check
    _
  $region11: #{show_lexeme_forward.1} parent=0 // pred_check_branch
    %15 = sbr.rel (0) target = $region13
  $region12: #{show_lexeme_forward.1} parent=0 // pred_region
    _
  $region13: #{show_lexeme_forward.1} parent=0 // pred_fallthru
    _
  // Predicated region
  $region14: #{show_lexeme_forward.1} parent=0 // pred_check
    _
  $region15: #{show_lexeme_forward.1} parent=0 // pred_check_branch
    %17 = sbr.rel (0) target = $region17
  $region16: #{show_lexeme_forward.1} parent=0 // pred_region
    _
  $region17: #{show_lexeme_forward.1} parent=0 // pred_fallthru
    _
  // Predicated region
  $region18: #{show_lexeme_forward.1} parent=0 // pred_check
    _
  $region19: #{show_lexeme_forward.1} parent=0 // pred_check_branch
    %19 = sbr.rel (0) target = $region21
  $region20: #{show_lexeme_forward.1} parent=0 // pred_region
    _
  $region21: #{show_lexeme_forward.1} parent=0 // pred_fallthru
    _
  %v21 = vlaneseq
  %v22 = vand.u32 %v21, 127
  %vm23 = vcmp.lt.s32.totalorder %v22, 0
  %v24 = vsub.s32 0, %v22
  %v25 = vsel %vm23, %v24, %v22
  %v26 = vshrl.u32 %v25, 5
  %v27 = vand.u32 %v25, 31
  %v28 = vsub.s32 0, %v27
  %v29 = vsel %vm23, %v28, %v27
  %vm30 = vcmp.ne.s32.totalorder %v29, 0
  %vm31 = vcmp.lt.s32.totalorder %v29, 0
  %vm32 = vmand %vm31, %vm30
  %v33 = vadd.s32 %v29, 32
  %v34 = vsel %vm32, %v33, %v29
  %vm35 = vcmp.ne.s32.totalorder %v34, 0
  %vm36 = vcmp.ne.s32.totalorder %v34, 31
  %v37 = vld [vmem:[%s1] sm:$0xff]
  %v38 = vld [vmem:[%s1 + $0x8] sm:$0xf]
  %v39 = vld [vmem:[%s1 + $0xc] sm:$0xff]
  %v40 = vld [vmem:[%s1 + $0x14] sm:$0xf]
  %v41 = vld [vmem:[%s1 + $0x18] sm:$0xff]
  %v42 = vld [vmem:[%s1 + $0x20] sm:$0xf]
  %v43 = vld [vmem:[%s1 + $0x24] sm:$0xff]
  %v44 = vld [vmem:[%s1 + $0x2c] sm:$0xf]
  %v45 = vld [vmem:[%s1 + $0x30] sm:$0xff]
  %v46 = vld [vmem:[%s1 + $0x38] sm:$0xf]
  %v47 = vld [vmem:[%s1 + $0x3c] sm:$0xff]
  %v48 = vld [vmem:[%s1 + $0x44] sm:$0xf]
  %v49 = vld [vmem:[%s1 + $0x48] sm:$0xff]
  %v50 = vld [vmem:[%s1 + $0x50] sm:$0xf]
  %v51 = vld [vmem:[%s1 + $0x54] sm:$0xff]
  %v52 = vld [vmem:[%s1 + $0x5c] sm:$0xf]
  %v53 = vld [vmem:[%s1 + $0x60] sm:$0xff]
  %v54 = vld [vmem:[%s1 + $0x68] sm:$0xf]
  %v55 = vld [vmem:[%s1 + $0x6c] sm:$0xff]
  %v56 = vld [vmem:[%s1 + $0x74] sm:$0xf]
  %v57 = vld [vmem:[%s1 + $0x78] sm:$0xff]
  %v58 = vld [vmem:[%s1 + $0x80] sm:$0xf]
  %v59 = vld [vmem:[%s1 + $0x84] sm:$0xff]
  %v60 = vld [vmem:[%s1 + $0x8c] sm:$0xf]
  %v61 = vld [vmem:[%s0] sm:$0xff]
  %v62 = vld [vmem:[%s0 + $0x8] sm:$0xff]
  %v63 = vld [vmem:[%s0 + $0x10] sm:$0xff]
  %v64 = vld [vmem:[%s0 + $0x18] sm:$0xff]
  %v65 = vld [vmem:[%s0 + $0x20] sm:$0xff]
  %v66 = vld [vmem:[%s0 + $0x28] sm:$0xff]
  %v67 = vld [vmem:[%s0 + $0x30] sm:$0xff]
  %v68 = vld [vmem:[%s0 + $0x38] sm:$0xff]
  %v69 = vld [vmem:[%s0 + $0x40] sm:$0xff]
  %v70 = vld [vmem:[%s0 + $0x48] sm:$0xff]
  %v71 = vld [vmem:[%s0 + $0x50] sm:$0xff]
  %v72 = vld [vmem:[%s0 + $0x58] sm:$0xff]
  %73 = vrot.lane.b32.xlu0 %v61, 1
  %v74 = vpop.permute.xlu0 %73
  %75 = vrot.lane.b32.xlu0 %v62, 1
  %v76 = vpop.permute.xlu0 %75
  %77 = vrot.lane.b32.xlu0 %v63, 1
  %v78 = vpop.permute.xlu0 %77
  %79 = vrot.lane.b32.xlu0 %v64, 1
  %v80 = vpop.permute.xlu0 %79
  %81 = vrot.lane.b32.xlu0 %v65, 1
  %v82 = vpop.permute.xlu0 %81
  %83 = vrot.lane.b32.xlu0 %v66, 1
  %v84 = vpop.permute.xlu0 %83
  %85 = vrot.lane.b32.xlu0 %v67, 1
  %v86 = vpop.permute.xlu0 %85
  %87 = vrot.lane.b32.xlu0 %v68, 1
  %v88 = vpop.permute.xlu0 %87
  %89 = vrot.lane.b32.xlu0 %v69, 1
  %v90 = vpop.permute.xlu0 %89
  %91 = vrot.lane.b32.xlu0 %v70, 1
  %v92 = vpop.permute.xlu0 %91
  %93 = vrot.lane.b32.xlu0 %v71, 1
  %v94 = vpop.permute.xlu0 %93
  %95 = vrot.lane.b32.xlu0 %v72, 1
  %v96 = vpop.permute.xlu0 %95
  %v97 = vsel %vm35, 1, 0
  %vm98 = vcmp.eq.s32.totalorder %v97, 1
  %v99 = vsel %vm98, %v74, 0.0
  %v100 = vsel %vm98, %v76, 0.0
  %v101 = vsel %vm98, %v78, 0.0
  %v102 = vsel %vm98, %v80, 0.0
  %v103 = vsel %vm98, %v82, 0.0
  %v104 = vsel %vm98, %v84, 0.0
  %v105 = vsel %vm98, %v86, 0.0
  %v106 = vsel %vm98, %v88, 0.0
  %v107 = vsel %vm98, %v90, 0.0
  %v108 = vsel %vm98, %v92, 0.0
  %v109 = vsel %vm98, %v94, 0.0
  %v110 = vsel %vm98, %v96, 0.0
  %111 = vrot.lane.b32.xlu0 %v61, 127
  %v112 = vpop.permute.xlu0 %111
  %113 = vrot.lane.b32.xlu0 %v62, 127
  %v114 = vpop.permute.xlu0 %113
  %115 = vrot.lane.b32.xlu0 %v63, 127
  %v116 = vpop.permute.xlu0 %115
  %117 = vrot.lane.b32.xlu0 %v64, 127
  %v118 = vpop.permute.xlu0 %117
  %119 = vrot.lane.b32.xlu0 %v65, 127
  %v120 = vpop.permute.xlu0 %119
  %121 = vrot.lane.b32.xlu0 %v66, 127
  %v122 = vpop.permute.xlu0 %121
  %123 = vrot.lane.b32.xlu0 %v67, 127
  %v124 = vpop.permute.xlu0 %123
  %125 = vrot.lane.b32.xlu0 %v68, 127
  %v126 = vpop.permute.xlu0 %125
  %127 = vrot.lane.b32.xlu0 %v69, 127
  %v128 = vpop.permute.xlu0 %127
  %129 = vrot.lane.b32.xlu0 %v70, 127
  %v130 = vpop.permute.xlu0 %129
  %131 = vrot.lane.b32.xlu0 %v71, 127
  %v132 = vpop.permute.xlu0 %131
  %133 = vrot.lane.b32.xlu0 %v72, 127
  %v134 = vpop.permute.xlu0 %133
  %v135 = vsel %vm36, 1, 0
  %vm136 = vcmp.eq.s32.totalorder %v135, 1
  %v137 = vsel %vm136, %v112, 0.0
  %v138 = vsel %vm136, %v114, 0.0
  %v139 = vsel %vm136, %v116, 0.0
  %v140 = vsel %vm136, %v118, 0.0
  %v141 = vsel %vm136, %v120, 0.0
  %v142 = vsel %vm136, %v122, 0.0
  %v143 = vsel %vm136, %v124, 0.0
  %v144 = vsel %vm136, %v126, 0.0
  %v145 = vsel %vm136, %v128, 0.0
  %v146 = vsel %vm136, %v130, 0.0
  %v147 = vsel %vm136, %v132, 0.0
  %v148 = vsel %vm136, %v134, 0.0
  %v149 = vpack.c.bf16 %v100, %v99
  %v150 = vpack.c.bf16 %v102, %v101
  %v151 = vpack.c.bf16 %v104, %v103
  %v152 = vpack.c.bf16 %v106, %v105
  %v153 = vpack.c.bf16 %v108, %v107
  %v154 = vpack.c.bf16 %v110, %v109
  %v155 = vpack.c.bf16 %v62, %v61
  %v156 = vpack.c.bf16 %v64, %v63
  %v157 = vpack.c.bf16 %v66, %v65
  %v158 = vpack.c.bf16 %v68, %v67
  %v159 = vpack.c.bf16 %v70, %v69
  %v160 = vpack.c.bf16 %v72, %v71
  %v161 = vpack.c.bf16 %v138, %v137
  %v162 = vpack.c.bf16 %v140, %v139
  %v163 = vpack.c.bf16 %v142, %v141
  %v164 = vpack.c.bf16 %v144, %v143
  %v165 = vpack.c.bf16 %v146, %v145
  %v166 = vpack.c.bf16 %v148, %v147
  %v167 = vld [vmem:[%s2] sm:$0xff]
  %v168 = vld [vmem:[%s2 + $0x8] sm:$0xff]
  %v169 = vld [vmem:[%s2 + $0x10] sm:$0xff]
  %v170 = vld [vmem:[%s2 + $0x18] sm:$0xff]
  %v171 = vld [vmem:[%s2 + $0x20] sm:$0xff]
  %v172 = vld [vmem:[%s2 + $0x28] sm:$0xff]
  %v173 = vld [vmem:[%s2 + $0x30] sm:$0xff]
  %v174 = vld [vmem:[%s2 + $0x38] sm:$0xff]
  %v175 = vld [vmem:[%s2 + $0x40] sm:$0xff]
  %v176 = vld [vmem:[%s2 + $0x48] sm:$0xff]
  %v177 = vld [vmem:[%s2 + $0x50] sm:$0xff]
  %v178 = vld [vmem:[%s2 + $0x58] sm:$0xff]
  %180 = vset.pattern.permute.xlu0 0
  %181 = vperm.xlu0 %180, %v167
  %v182 = vpop.permute.xlu0 %181
  %185 = vset.pattern.permute.xlu0 0
  %186 = vperm.xlu0 %185, %v168
  %v187 = vpop.permute.xlu0 %186
  %190 = vset.pattern.permute.xlu0 0
  %191 = vperm.xlu0 %190, %v169
  %v192 = vpop.permute.xlu0 %191
  %195 = vset.pattern.permute.xlu0 0
  %196 = vperm.xlu0 %195, %v170
  %v197 = vpop.permute.xlu0 %196
  %200 = vset.pattern.permute.xlu0 0
  %201 = vperm.xlu0 %200, %v171
  %v202 = vpop.permute.xlu0 %201
  %205 = vset.pattern.permute.xlu0 0
  %206 = vperm.xlu0 %205, %v172
  %v207 = vpop.permute.xlu0 %206
  %210 = vset.pattern.permute.xlu0 0
  %211 = vperm.xlu0 %210, %v173
  %v212 = vpop.permute.xlu0 %211
  %215 = vset.pattern.permute.xlu0 0
  %216 = vperm.xlu0 %215, %v174
  %v217 = vpop.permute.xlu0 %216
  %220 = vset.pattern.permute.xlu0 0
  %221 = vperm.xlu0 %220, %v175
  %v222 = vpop.permute.xlu0 %221
  %225 = vset.pattern.permute.xlu0 0
  %226 = vperm.xlu0 %225, %v176
  %v227 = vpop.permute.xlu0 %226
  %230 = vset.pattern.permute.xlu0 0
  %231 = vperm.xlu0 %230, %v177
  %v232 = vpop.permute.xlu0 %231
  %235 = vset.pattern.permute.xlu0 0
  %236 = vperm.xlu0 %235, %v178
  %v237 = vpop.permute.xlu0 %236
  %v263 = vunpack.c.l.b16 %v37
  %v264 = vunpack.c.h.b16 %v37
  %v265 = vunpack.c.l.b16 %v38
  %v266 = vunpack.c.l.b16 %v39
  %v267 = vunpack.c.h.b16 %v39
  %v268 = vunpack.c.l.b16 %v40
  %v269 = vunpack.c.l.b16 %v41
  %v270 = vunpack.c.h.b16 %v41
  %v271 = vunpack.c.l.b16 %v42
  %v272 = vunpack.c.l.b16 %v43
  %v273 = vunpack.c.h.b16 %v43
  %v274 = vunpack.c.l.b16 %v44
  %v275 = vunpack.c.l.b16 %v45
  %v276 = vunpack.c.h.b16 %v45
  %v277 = vunpack.c.l.b16 %v46
  %v278 = vunpack.c.l.b16 %v47
  %v279 = vunpack.c.h.b16 %v47
  %v280 = vunpack.c.l.b16 %v48
  %v281 = vunpack.c.l.b16 %v49
  %v282 = vunpack.c.h.b16 %v49
  %v283 = vunpack.c.l.b16 %v50
  %v284 = vunpack.c.l.b16 %v51
  %v285 = vunpack.c.h.b16 %v51
  %v286 = vunpack.c.l.b16 %v52
  %v287 = vunpack.c.l.b16 %v53
  %v288 = vunpack.c.h.b16 %v53
  %v289 = vunpack.c.l.b16 %v54
  %v290 = vunpack.c.l.b16 %v55
  %v291 = vunpack.c.h.b16 %v55
  %v292 = vunpack.c.l.b16 %v56
  %v293 = vunpack.c.l.b16 %v57
  %v294 = vunpack.c.h.b16 %v57
  %v295 = vunpack.c.l.b16 %v58
  %v296 = vunpack.c.l.b16 %v59
  %v297 = vunpack.c.h.b16 %v59
  %v298 = vunpack.c.l.b16 %v60
  %v299 = vpack.c.b16 %v266, %v263
  %v300 = vpack.c.b16 %v267, %v264
  %v301 = vpack.c.b16 %v268, %v265
  %v302 = vpack.c.b16 %v272, %v269
  %v303 = vpack.c.b16 %v273, %v270
  %v304 = vpack.c.b16 %v274, %v271
  %v305 = vpack.c.b16 %v278, %v275
  %v306 = vpack.c.b16 %v279, %v276
  %v307 = vpack.c.b16 %v280, %v277
  %v308 = vpack.c.b16 %v284, %v281
  %v309 = vpack.c.b16 %v285, %v282
  %v310 = vpack.c.b16 %v286, %v283
  %v311 = vpack.c.b16 %v290, %v287
  %v312 = vpack.c.b16 %v291, %v288
  %v313 = vpack.c.b16 %v292, %v289
  %v314 = vpack.c.b16 %v296, %v293
  %v315 = vpack.c.b16 %v297, %v294
  %v316 = vpack.c.b16 %v298, %v295
  %vm329 = vcmask 261120
  %v331 = vsel %vm329, %v301, 0
  %v334 = vsel %vm329, %v304, 0
  %v337 = vsel %vm329, %v307, 0
  %v340 = vsel %vm329, %v310, 0
  %v343 = vsel %vm329, %v313, 0
  %v346 = vsel %vm329, %v316, 0
  %348 = vmatprep.subr.bf16.mxu0 0
  %349 = vmatpush1.bf16.msra.mxu0 %v149
  %350 = vmatprep.subr.bf16.mxu0 0
  %351 = vmatpush1.bf16.msra.mxu0 %v150
  %352 = vmatprep.subr.bf16.mxu0 0
  %353 = vmatpush1.bf16.msra.mxu0 %v151
  %354 = vmatprep.subr.bf16.mxu0 0
  %355 = vmatpush1.bf16.msra.mxu0 %v152
  %356 = vmatprep.subr.bf16.mxu0 0
  %357 = vmatpush1.bf16.msra.mxu0 %v153
  %358 = vmatprep.subr.bf16.mxu0 0
  %359 = vmatpush1.bf16.msra.mxu0 %v154
  %360 = vmatprep.subr.bf16.mxu0 0
  %361 = vmatpush1.bf16.msra.mxu0 %v155
  %362 = vmatprep.subr.bf16.mxu0 0
  %363 = vmatpush1.bf16.msra.mxu0 %v156
  %364 = vmatprep.subr.bf16.mxu0 0
  %365 = vmatpush1.bf16.msra.mxu0 %v157
  %366 = vmatprep.subr.bf16.mxu0 0
  %367 = vmatpush1.bf16.msra.mxu0 %v158
  %368 = vmatprep.subr.bf16.mxu0 0
  %369 = vmatpush1.bf16.msra.mxu0 %v159
  %370 = vmatprep.subr.bf16.mxu0 0
  %371 = vmatpush1.bf16.msra.mxu0 %v160
  %372 = vmatprep.subr.bf16.mxu0 0
  %373 = vmatpush1.bf16.msra.mxu0 %v161
  %374 = vmatprep.subr.bf16.mxu0 0
  %375 = vmatpush1.bf16.msra.mxu0 %v162
  %376 = vmatprep.subr.bf16.mxu0 0
  %377 = vmatpush1.bf16.msra.mxu0 %v163
  %378 = vmatprep.subr.bf16.mxu0 0
  %379 = vmatpush1.bf16.msra.mxu0 %v164
  %380 = vmatprep.mubr.bf16.mxu0 %v300
  %381 = vmatmul.mubr.bf16.gmra.mrb[0].mxu0 %v299
  %v382 = vpop.f32.mrb[0].mxu0
  %v383 = vadd.f32 %v182, %v382
  %v384 = vpop.f32.mrb[0].mxu0
  %v385 = vpop.f32.mrb[0].mxu0
  %v386 = vadd.f32 %v187, %v385
  %v387 = vpop.f32.mrb[0].mxu0
  %388 = vmatprep.mubr.bf16.mxu0 %v303
  %389 = vmatmul.mubr.bf16.gmra.mrb[0].mxu0 %v302
  %v390 = vpop.f32.mrb[0].mxu0
  %v391 = vadd.f32 %v192, %v390
  %v392 = vpop.f32.mrb[0].mxu0
  %v393 = vpop.f32.mrb[0].mxu0
  %v394 = vadd.f32 %v197, %v393
  %v395 = vpop.f32.mrb[0].mxu0
  %396 = vmatprep.mubr.bf16.mxu0 %v306
  %397 = vmatmul.mubr.bf16.gmra.mrb[0].mxu0 %v305
  %v398 = vpop.f32.mrb[0].mxu0
  %v399 = vadd.f32 %v202, %v398
  %v400 = vpop.f32.mrb[0].mxu0
  %v401 = vpop.f32.mrb[0].mxu0
  %v402 = vadd.f32 %v207, %v401
  %v403 = vpop.f32.mrb[0].mxu0
  %404 = vmatprep.mubr.bf16.mxu0 %v309
  %405 = vmatmul.mubr.bf16.gmra.mrb[0].mxu0 %v308
  %v406 = vpop.f32.mrb[0].mxu0
  %v407 = vadd.f32 %v212, %v406
  %v408 = vpop.f32.mrb[0].mxu0
  %v409 = vpop.f32.mrb[0].mxu0
  %v410 = vadd.f32 %v217, %v409
  %v411 = vpop.f32.mrb[0].mxu0
  %412 = vmatprep.mubr.bf16.mxu0 %v312
  %413 = vmatmul.mubr.bf16.gmra.mrb[0].mxu0 %v311
  %v414 = vpop.f32.mrb[0].mxu0
  %v415 = vadd.f32 %v222, %v414
  %v416 = vpop.f32.mrb[0].mxu0
  %v417 = vpop.f32.mrb[0].mxu0
  %v418 = vadd.f32 %v227, %v417
  %v419 = vpop.f32.mrb[0].mxu0
  %420 = vmatprep.mubr.bf16.mxu0 %v315
  %421 = vmatmul.mubr.bf16.gmra.mrb[0].mxu0 %v314
  %v422 = vpop.f32.mrb[0].mxu0
  %v423 = vadd.f32 %v232, %v422
  %v424 = vpop.f32.mrb[0].mxu0
  %v425 = vpop.f32.mrb[0].mxu0
  %v426 = vadd.f32 %v237, %v425
  %v427 = vpop.f32.mrb[0].mxu0
  %428 = vdwg.mxu0
  %429 = vmatprep.subr.bf16.mxu0 0
  %430 = vmatpush1.bf16.msra.mxu0 %v165
  %431 = vmatprep.subr.bf16.mxu0 0
  %432 = vmatpush1.bf16.msra.mxu0 %v166
  %433 = vmatprep.subr.bf16.mxu0 0
  %434 = vmatpush1.bf16.msra.mxu0 0
  %435 = vmatprep.subr.bf16.mxu0 0
  %436 = vmatpush1.bf16.msra.mxu0 0
  %437 = vmatprep.subr.bf16.mxu0 0
  %438 = vmatpush1.bf16.msra.mxu0 0
  %439 = vmatprep.subr.bf16.mxu0 0
  %440 = vmatpush1.bf16.msra.mxu0 0
  %441 = vmatprep.subr.bf16.mxu0 0
  %442 = vmatpush1.bf16.msra.mxu0 0
  %443 = vmatprep.subr.bf16.mxu0 0
  %444 = vmatpush1.bf16.msra.mxu0 0
  %445 = vmatprep.subr.bf16.mxu0 0
  %446 = vmatpush1.bf16.msra.mxu0 0
  %447 = vmatprep.subr.bf16.mxu0 0
  %448 = vmatpush1.bf16.msra.mxu0 0
  %449 = vmatprep.subr.bf16.mxu0 0
  %450 = vmatpush1.bf16.msra.mxu0 0
  %451 = vmatprep.subr.bf16.mxu0 0
  %452 = vmatpush1.bf16.msra.mxu0 0
  %453 = vmatprep.subr.bf16.mxu0 0
  %454 = vmatpush1.bf16.msra.mxu0 0
  %455 = vmatprep.subr.bf16.mxu0 0
  %456 = vmatpush1.bf16.msra.mxu0 0
  %457 = vmatprep.subr.bf16.mxu0 0
  %458 = vmatpush1.bf16.msra.mxu0 0
  %459 = vmatprep.subr.bf16.mxu0 0
  %460 = vmatpush1.bf16.msra.mxu0 0
  %461 = vmatprep.mubr.bf16.mxu0 0
  %462 = vmatmul.mubr.bf16.gmra.mrb[0].mxu0 %v331
  %v463 = vpop.f32.mrb[0].mxu0
  %v464 = vadd.f32 %v383, %v463
  %v465 = vpop.f32.mrb[0].mxu0
  %v466 = vpop.f32.mrb[0].mxu0
  %v467 = vadd.f32 %v386, %v466
  %v468 = vpop.f32.mrb[0].mxu0
  %469 = vmatprep.mubr.bf16.mxu0 0
  %470 = vmatmul.mubr.bf16.gmra.mrb[0].mxu0 %v334
  %v471 = vpop.f32.mrb[0].mxu0
  %v472 = vadd.f32 %v391, %v471
  %v473 = vpop.f32.mrb[0].mxu0
  %v474 = vpop.f32.mrb[0].mxu0
  %v475 = vadd.f32 %v394, %v474
  %v476 = vpop.f32.mrb[0].mxu0
  %477 = vmatprep.mubr.bf16.mxu0 0
  %478 = vmatmul.mubr.bf16.gmra.mrb[0].mxu0 %v337
  %v479 = vpop.f32.mrb[0].mxu0
  %v480 = vadd.f32 %v399, %v479
  %v481 = vpop.f32.mrb[0].mxu0
  %v482 = vpop.f32.mrb[0].mxu0
  %v483 = vadd.f32 %v402, %v482
  %v484 = vpop.f32.mrb[0].mxu0
  %485 = vmatprep.mubr.bf16.mxu0 0
  %486 = vmatmul.mubr.bf16.gmra.mrb[0].mxu0 %v340
  %v487 = vpop.f32.mrb[0].mxu0
  %v488 = vadd.f32 %v407, %v487
  %v489 = vpop.f32.mrb[0].mxu0
  %v490 = vpop.f32.mrb[0].mxu0
  %v491 = vadd.f32 %v410, %v490
  %v492 = vpop.f32.mrb[0].mxu0
  %493 = vmatprep.mubr.bf16.mxu0 0
  %494 = vmatmul.mubr.bf16.gmra.mrb[0].mxu0 %v343
  %v495 = vpop.f32.mrb[0].mxu0
  %v496 = vadd.f32 %v415, %v495
  %v497 = vpop.f32.mrb[0].mxu0
  %v498 = vpop.f32.mrb[0].mxu0
  %v499 = vadd.f32 %v418, %v498
  %v500 = vpop.f32.mrb[0].mxu0
  %501 = vmatprep.mubr.bf16.mxu0 0
  %502 = vmatmul.mubr.bf16.gmra.mrb[0].mxu0 %v346
  %v503 = vpop.f32.mrb[0].mxu0
  %v504 = vadd.f32 %v423, %v503
  %v505 = vpop.f32.mrb[0].mxu0
  %v506 = vpop.f32.mrb[0].mxu0
  %v507 = vadd.f32 %v426, %v506
  %v508 = vpop.f32.mrb[0].mxu0
  %509 = vdwg.mxu0
  %v510 = vmul.f32 %v464, 0.2
  %v511 = vmul.f32 %v467, 0.2
  %v512 = vmul.f32 %v472, 0.2
  %v513 = vmul.f32 %v475, 0.2
  %v514 = vmul.f32 %v480, 0.2
  %v515 = vmul.f32 %v483, 0.2
  %v516 = vmul.f32 %v488, 0.2
  %v517 = vmul.f32 %v491, 0.2
  %v518 = vmul.f32 %v496, 0.2
  %v519 = vmul.f32 %v499, 0.2
  %v520 = vmul.f32 %v504, 0.2
  %v521 = vmul.f32 %v507, 0.2
  %v522 = vmax.f32 %v464, %v510
  %v523 = vmax.f32 %v467, %v511
  %v524 = vmax.f32 %v472, %v512
  %v525 = vmax.f32 %v475, %v513
  %v526 = vmax.f32 %v480, %v514
  %v527 = vmax.f32 %v483, %v515
  %v528 = vmax.f32 %v488, %v516
  %v529 = vmax.f32 %v491, %v517
  %v530 = vmax.f32 %v496, %v518
  %v531 = vmax.f32 %v499, %v519
  %v532 = vmax.f32 %v504, %v520
  %v533 = vmax.f32 %v507, %v521
  %v534 = vld [vmem:[%s3] sm:$0xff]
  %v535 = vld [vmem:[%s3 + $0x8] sm:$0xf]
  %v536 = vld [vmem:[%s3 + $0xc] sm:$0xff]
  %v537 = vld [vmem:[%s3 + $0x14] sm:$0xf]
  %v538 = vld [vmem:[%s3 + $0x18] sm:$0xff]
  %v539 = vld [vmem:[%s3 + $0x20] sm:$0xf]
  %v540 = vld [vmem:[%s3 + $0x24] sm:$0xff]
  %v541 = vld [vmem:[%s3 + $0x2c] sm:$0xf]
  %v542 = vld [vmem:[%s3 + $0x30] sm:$0xff]
  %v543 = vld [vmem:[%s3 + $0x38] sm:$0xf]
  %v544 = vld [vmem:[%s3 + $0x3c] sm:$0xff]
  %v545 = vld [vmem:[%s3 + $0x44] sm:$0xf]
  %546 = vrot.lane.b32.xlu0 %v522, 1
  %v547 = vpop.permute.xlu0 %546
  %548 = vrot.lane.b32.xlu0 %v523, 1
  %v549 = vpop.permute.xlu0 %548
  %550 = vrot.lane.b32.xlu0 %v524, 1
  %v551 = vpop.permute.xlu0 %550
  %552 = vrot.lane.b32.xlu0 %v525, 1
  %v553 = vpop.permute.xlu0 %552
  %554 = vrot.lane.b32.xlu0 %v526, 1
  %v555 = vpop.permute.xlu0 %554
  %556 = vrot.lane.b32.xlu0 %v527, 1
  %v557 = vpop.permute.xlu0 %556
  %558 = vrot.lane.b32.xlu0 %v528, 1
  %v559 = vpop.permute.xlu0 %558
  %560 = vrot.lane.b32.xlu0 %v529, 1
  %v561 = vpop.permute.xlu0 %560
  %562 = vrot.lane.b32.xlu0 %v530, 1
  %v563 = vpop.permute.xlu0 %562
  %564 = vrot.lane.b32.xlu0 %v531, 1
  %v565 = vpop.permute.xlu0 %564
  %566 = vrot.lane.b32.xlu0 %v532, 1
  %v567 = vpop.permute.xlu0 %566
  %568 = vrot.lane.b32.xlu0 %v533, 1
  %v569 = vpop.permute.xlu0 %568
  %v570 = vsel %vm98, %v547, 0.0
  %v571 = vsel %vm98, %v549, 0.0
  %v572 = vsel %vm98, %v551, 0.0
  %v573 = vsel %vm98, %v553, 0.0
  %v574 = vsel %vm98, %v555, 0.0
  %v575 = vsel %vm98, %v557, 0.0
  %v576 = vsel %vm98, %v559, 0.0
  %v577 = vsel %vm98, %v561, 0.0
  %v578 = vsel %vm98, %v563, 0.0
  %v579 = vsel %vm98, %v565, 0.0
  %v580 = vsel %vm98, %v567, 0.0
  %v581 = vsel %vm98, %v569, 0.0
  %582 = vrot.lane.b32.xlu0 %v522, 127
  %v583 = vpop.permute.xlu0 %582
  %584 = vrot.lane.b32.xlu0 %v523, 127
  %v585 = vpop.permute.xlu0 %584
  %586 = vrot.lane.b32.xlu0 %v524, 127
  %v587 = vpop.permute.xlu0 %586
  %588 = vrot.lane.b32.xlu0 %v525, 127
  %v589 = vpop.permute.xlu0 %588
  %590 = vrot.lane.b32.xlu0 %v526, 127
  %v591 = vpop.permute.xlu0 %590
  %592 = vrot.lane.b32.xlu0 %v527, 127
  %v593 = vpop.permute.xlu0 %592
  %594 = vrot.lane.b32.xlu0 %v528, 127
  %v595 = vpop.permute.xlu0 %594
  %596 = vrot.lane.b32.xlu0 %v529, 127
  %v597 = vpop.permute.xlu0 %596
  %598 = vrot.lane.b32.xlu0 %v530, 127
  %v599 = vpop.permute.xlu0 %598
  %600 = vrot.lane.b32.xlu0 %v531, 127
  %v601 = vpop.permute.xlu0 %600
  %602 = vrot.lane.b32.xlu0 %v532, 127
  %v603 = vpop.permute.xlu0 %602
  %604 = vrot.lane.b32.xlu0 %v533, 127
  %v605 = vpop.permute.xlu0 %604
  %v606 = vsel %vm136, %v583, 0.0
  %v607 = vsel %vm136, %v585, 0.0
  %v608 = vsel %vm136, %v587, 0.0
  %v609 = vsel %vm136, %v589, 0.0
  %v610 = vsel %vm136, %v591, 0.0
  %v611 = vsel %vm136, %v593, 0.0
  %v612 = vsel %vm136, %v595, 0.0
  %v613 = vsel %vm136, %v597, 0.0
  %v614 = vsel %vm136, %v599, 0.0
  %v615 = vsel %vm136, %v601, 0.0
  %v616 = vsel %vm136, %v603, 0.0
  %v617 = vsel %vm136, %v605, 0.0
  %v618 = vpack.c.bf16 %v571, %v570
  %v619 = vpack.c.bf16 %v573, %v572
  %v620 = vpack.c.bf16 %v575, %v574
  %v621 = vpack.c.bf16 %v577, %v576
  %v622 = vpack.c.bf16 %v579, %v578
  %v623 = vpack.c.bf16 %v581, %v580
  %v624 = vpack.c.bf16 %v523, %v522
  %v625 = vpack.c.bf16 %v525, %v524
  %v626 = vpack.c.bf16 %v527, %v526
  %v627 = vpack.c.bf16 %v529, %v528
  %v628 = vpack.c.bf16 %v531, %v530
  %v629 = vpack.c.bf16 %v533, %v532
  %v630 = vpack.c.bf16 %v607, %v606
  %v631 = vpack.c.bf16 %v609, %v608
  %v632 = vpack.c.bf16 %v611, %v610
  %v633 = vpack.c.bf16 %v613, %v612
  %v634 = vpack.c.bf16 %v615, %v614
  %v635 = vpack.c.bf16 %v617, %v616
  %v636 = vld [vmem:[%s4] sm:$0xff]
  %v637 = vld [vmem:[%s4 + $0x8] sm:$0xff]
  %v638 = vld [vmem:[%s4 + $0x10] sm:$0xff]
  %v639 = vld [vmem:[%s4 + $0x18] sm:$0xff]
  %v640 = vld [vmem:[%s4 + $0x20] sm:$0xff]
  %v641 = vld [vmem:[%s4 + $0x28] sm:$0xff]
  %643 = vset.pattern.permute.xlu0 0
  %644 = vperm.xlu0 %643, %v636
  %v645 = vpop.permute.xlu0 %644
  %648 = vset.pattern.permute.xlu0 0
  %649 = vperm.xlu0 %648, %v637
  %v650 = vpop.permute.xlu0 %649
  %653 = vset.pattern.permute.xlu0 0
  %654 = vperm.xlu0 %653, %v638
  %v655 = vpop.permute.xlu0 %654
  %658 = vset.pattern.permute.xlu0 0
  %659 = vperm.xlu0 %658, %v639
  %v660 = vpop.permute.xlu0 %659
  %663 = vset.pattern.permute.xlu0 0
  %664 = vperm.xlu0 %663, %v640
  %v665 = vpop.permute.xlu0 %664
  %668 = vset.pattern.permute.xlu0 0
  %669 = vperm.xlu0 %668, %v641
  %v670 = vpop.permute.xlu0 %669
  %v684 = vunpack.c.l.b16 %v534
  %v685 = vunpack.c.h.b16 %v534
  %v686 = vunpack.c.l.b16 %v535
  %v687 = vunpack.c.l.b16 %v536
  %v688 = vunpack.c.h.b16 %v536
  %v689 = vunpack.c.l.b16 %v537
  %v690 = vunpack.c.l.b16 %v538
  %v691 = vunpack.c.h.b16 %v538
  %v692 = vunpack.c.l.b16 %v539
  %v693 = vunpack.c.l.b16 %v540
  %v694 = vunpack.c.h.b16 %v540
  %v695 = vunpack.c.l.b16 %v541
  %v696 = vunpack.c.l.b16 %v542
  %v697 = vunpack.c.h.b16 %v542
  %v698 = vunpack.c.l.b16 %v543
  %v699 = vunpack.c.l.b16 %v544
  %v700 = vunpack.c.h.b16 %v544
  %v701 = vunpack.c.l.b16 %v545
  %v702 = vpack.c.b16 %v687, %v684
  %v703 = vpack.c.b16 %v688, %v685
  %v704 = vpack.c.b16 %v689, %v686
  %v705 = vpack.c.b16 %v693, %v690
  %v706 = vpack.c.b16 %v694, %v691
  %v707 = vpack.c.b16 %v695, %v692
  %v708 = vpack.c.b16 %v699, %v696
  %v709 = vpack.c.b16 %v700, %v697
  %v710 = vpack.c.b16 %v701, %v698
  %v718 = vsel %vm329, %v704, 0
  %v721 = vsel %vm329, %v707, 0
  %v724 = vsel %vm329, %v710, 0
  %726 = vmatprep.subr.bf16.mxu0 0
  %727 = vmatpush1.bf16.msra.mxu0 %v618
  %728 = vmatprep.subr.bf16.mxu0 0
  %729 = vmatpush1.bf16.msra.mxu0 %v619
  %730 = vmatprep.subr.bf16.mxu0 0
  %731 = vmatpush1.bf16.msra.mxu0 %v620
  %732 = vmatprep.subr.bf16.mxu0 0
  %733 = vmatpush1.bf16.msra.mxu0 %v621
  %734 = vmatprep.subr.bf16.mxu0 0
  %735 = vmatpush1.bf16.msra.mxu0 %v622
  %736 = vmatprep.subr.bf16.mxu0 0
  %737 = vmatpush1.bf16.msra.mxu0 %v623
  %738 = vmatprep.subr.bf16.mxu0 0
  %739 = vmatpush1.bf16.msra.mxu0 %v624
  %740 = vmatprep.subr.bf16.mxu0 0
  %741 = vmatpush1.bf16.msra.mxu0 %v625
  %742 = vmatprep.subr.bf16.mxu0 0
  %743 = vmatpush1.bf16.msra.mxu0 %v626
  %744 = vmatprep.subr.bf16.mxu0 0
  %745 = vmatpush1.bf16.msra.mxu0 %v627
  %746 = vmatprep.subr.bf16.mxu0 0
  %747 = vmatpush1.bf16.msra.mxu0 %v628
  %748 = vmatprep.subr.bf16.mxu0 0
  %749 = vmatpush1.bf16.msra.mxu0 %v629
  %750 = vmatprep.subr.bf16.mxu0 0
  %751 = vmatpush1.bf16.msra.mxu0 %v630
  %752 = vmatprep.subr.bf16.mxu0 0
  %753 = vmatpush1.bf16.msra.mxu0 %v631
  %754 = vmatprep.subr.bf16.mxu0 0
  %755 = vmatpush1.bf16.msra.mxu0 %v632
  %756 = vmatprep.subr.bf16.mxu0 0
  %757 = vmatpush1.bf16.msra.mxu0 %v633
  %758 = vmatprep.mubr.bf16.mxu0 %v703
  %759 = vmatmul.mubr.bf16.gmra.mrb[0].mxu0 %v702
  %v760 = vpop.f32.mrb[0].mxu0
  %v761 = vadd.f32 %v645, %v760
  %v762 = vpop.f32.mrb[0].mxu0
  %v763 = vpop.f32.mrb[0].mxu0
  %v764 = vadd.f32 %v650, %v763
  %v765 = vpop.f32.mrb[0].mxu0
  %766 = vmatprep.mubr.bf16.mxu0 %v706
  %767 = vmatmul.mubr.bf16.gmra.mrb[0].mxu0 %v705
  %v768 = vpop.f32.mrb[0].mxu0
  %v769 = vadd.f32 %v655, %v768
  %v770 = vpop.f32.mrb[0].mxu0
  %v771 = vpop.f32.mrb[0].mxu0
  %v772 = vadd.f32 %v660, %v771
  %v773 = vpop.f32.mrb[0].mxu0
  %774 = vmatprep.mubr.bf16.mxu0 %v709
  %775 = vmatmul.mubr.bf16.gmra.mrb[0].mxu0 %v708
  %v776 = vpop.f32.mrb[0].mxu0
  %v777 = vadd.f32 %v665, %v776
  %v778 = vpop.f32.mrb[0].mxu0
  %v779 = vpop.f32.mrb[0].mxu0
  %v780 = vadd.f32 %v670, %v779
  %v781 = vpop.f32.mrb[0].mxu0
  %782 = vdwg.mxu0
  %783 = vmatprep.subr.bf16.mxu0 0
  %784 = vmatpush1.bf16.msra.mxu0 %v634
  %785 = vmatprep.subr.bf16.mxu0 0
  %786 = vmatpush1.bf16.msra.mxu0 %v635
  %787 = vmatprep.subr.bf16.mxu0 0
  %788 = vmatpush1.bf16.msra.mxu0 0
  %789 = vmatprep.subr.bf16.mxu0 0
  %790 = vmatpush1.bf16.msra.mxu0 0
  %791 = vmatprep.subr.bf16.mxu0 0
  %792 = vmatpush1.bf16.msra.mxu0 0
  %793 = vmatprep.subr.bf16.mxu0 0
  %794 = vmatpush1.bf16.msra.mxu0 0
  %795 = vmatprep.subr.bf16.mxu0 0
  %796 = vmatpush1.bf16.msra.mxu0 0
  %797 = vmatprep.subr.bf16.mxu0 0
  %798 = vmatpush1.bf16.msra.mxu0 0
  %799 = vmatprep.subr.bf16.mxu0 0
  %800 = vmatpush1.bf16.msra.mxu0 0
  %801 = vmatprep.subr.bf16.mxu0 0
  %802 = vmatpush1.bf16.msra.mxu0 0
  %803 = vmatprep.subr.bf16.mxu0 0
  %804 = vmatpush1.bf16.msra.mxu0 0
  %805 = vmatprep.subr.bf16.mxu0 0
  %806 = vmatpush1.bf16.msra.mxu0 0
  %807 = vmatprep.subr.bf16.mxu0 0
  %808 = vmatpush1.bf16.msra.mxu0 0
  %809 = vmatprep.subr.bf16.mxu0 0
  %810 = vmatpush1.bf16.msra.mxu0 0
  %811 = vmatprep.subr.bf16.mxu0 0
  %812 = vmatpush1.bf16.msra.mxu0 0
  %813 = vmatprep.subr.bf16.mxu0 0
  %814 = vmatpush1.bf16.msra.mxu0 0
  %815 = vmatprep.mubr.bf16.mxu0 0
  %816 = vmatmul.mubr.bf16.gmra.mrb[0].mxu0 %v718
  %v817 = vpop.f32.mrb[0].mxu0
  %v818 = vadd.f32 %v761, %v817
  %v819 = vpop.f32.mrb[0].mxu0
  %v820 = vpop.f32.mrb[0].mxu0
  %v821 = vadd.f32 %v764, %v820
  %v822 = vpop.f32.mrb[0].mxu0
  %823 = vmatprep.mubr.bf16.mxu0 0
  %824 = vmatmul.mubr.bf16.gmra.mrb[0].mxu0 %v721
  %v825 = vpop.f32.mrb[0].mxu0
  %v826 = vadd.f32 %v769, %v825
  %v827 = vpop.f32.mrb[0].mxu0
  %v828 = vpop.f32.mrb[0].mxu0
  %v829 = vadd.f32 %v772, %v828
  %v830 = vpop.f32.mrb[0].mxu0
  %831 = vmatprep.mubr.bf16.mxu0 0
  %832 = vmatmul.mubr.bf16.gmra.mrb[0].mxu0 %v724
  %v833 = vpop.f32.mrb[0].mxu0
  %v834 = vadd.f32 %v777, %v833
  %v835 = vpop.f32.mrb[0].mxu0
  %v836 = vpop.f32.mrb[0].mxu0
  %v837 = vadd.f32 %v780, %v836
  %v838 = vpop.f32.mrb[0].mxu0
  %839 = vdwg.mxu0
  %840 = vst [vmem:[%s5] sm:$0xff] %v818
  %841 = vst [vmem:[%s5 + $0x8] sm:$0xff] %v821
  %842 = vst [vmem:[%s5 + $0x10] sm:$0xff] %v826
  %843 = vst [vmem:[%s5 + $0x18] sm:$0xff] %v829
  %844 = vst [vmem:[%s5 + $0x20] sm:$0xff] %v834
  %845 = vst [vmem:[%s5 + $0x28] sm:$0xff] %v837
  // Predicated region
  $region22: #{show_lexeme_forward.1} parent=0 // pred_check
    _
  $region23: #{show_lexeme_forward.1} parent=0 // pred_check_branch
    %847 = sbr.rel (0) target = $region25
  $region24: #{show_lexeme_forward.1} parent=0 // pred_region
    _
  $region25: #{show_lexeme_forward.1} parent=0 // pred_fallthru
    _
  // Predicated region
  $region26: #{show_lexeme_forward.1} parent=0 // pred_check
    _
  $region27: #{show_lexeme_forward.1} parent=0 // pred_check_branch
    %849 = sbr.rel (0) target = $region29
  $region28: #{show_lexeme_forward.1} parent=0 // pred_region
    _
  $region29: #{show_lexeme_forward.1} parent=0 // pred_fallthru
    _

</llo_original>
